<compile_context>
chip_gen: v7x
topology: tpu7x:2x2x1
jax: 0.10.0
libtpu: 0.0.40
codegen_flags: <defaults>
</compile_context>

<pallas_src>
import jax
import jax.numpy as jnp
from jax.experimental import pallas as pl
from jax.experimental.pallas import tpu as pltpu


def lr_kernel(x_ref, w_ref, b_ref, o_ref, acc_ref):
    k = pl.program_id(1)

    @pl.when(k == 0)
    def _():
        # Fold the bias (SMEM scalar) into the accumulator init.
        acc_ref[...] = jnp.full_like(acc_ref, b_ref[0])

    # VPU multiply with lane-major weights + lane reduce; f32 accumulate.
    acc_ref[...] += jnp.sum(
        x_ref[...] * w_ref[...], axis=-1, keepdims=True
    ).astype(jnp.float32)

    @pl.when(k == pl.num_programs(1) - 1)
    def _():
        o_ref[...] = acc_ref[...].astype(o_ref.dtype)


def _largest_aligned_divisor(n, cap, align):
    """Largest multiple of `align` that divides n and is <= cap (0 if none)."""
    t = (cap // align) * align
    while t >= align:
        if n % t == 0:
            return t
        t -= align
    return 0


def _plan_tiles(B, F, *, max_tm=512, x_vmem_budget=24 << 20):
    """Pick (tm, tk) and padded extents (Bp, Fp)."""
    # ---- row (batch) tile ----
    if B <= max_tm:
        tm, Bp = B, B                       # single full-dim row block, no padding
    else:
        tm = _largest_aligned_divisor(B, max_tm, 8)
        if tm < 64:                         # divisor too small -> pad instead
            tm = max_tm
        Bp = pl.cdiv(B, tm) * tm
    # ---- feature (reduction) tile: biggest that keeps 2 x-tiles in budget ----
    sub_rows = max(tm, 8)                   # sublane-padded rows actually resident
    tk_cap = (x_vmem_budget // (2 * sub_rows * 4)) // 128 * 128
    tk_cap = max(tk_cap, 512)
    if F <= tk_cap:
        tk, Fp = F, F                       # single K step, no padding
    else:
        tk = _largest_aligned_divisor(F, tk_cap, 128)
        if tk < tk_cap // 4:                # divisor too small -> pad instead
            tk = tk_cap
        Fp = pl.cdiv(F, tk) * tk
    return tm, tk, Bp, Fp


def lr_forward(x, weight, bias):
    """Pallas implementation of LR.forward.

    x:      (B, in_len, input_size) float32
    weight: (1, F) float32   (PyTorch Linear layout: (out_features, in_features))
    bias:   (1,)   float32
    returns (B, 1) float32
    """
    B = x.shape[0]
    x2d = x.reshape(B, -1).astype(jnp.float32)          # (B, F)
    F = x2d.shape[1]
    w = weight.reshape(1, F).astype(jnp.float32)        # lane-major, no transpose
    b = bias.reshape(1).astype(jnp.float32)             # scalar -> SMEM

    tm, tk, Bp, Fp = _plan_tiles(B, F)

    # Zero-pad only when the grid cannot tile exactly (zeros add nothing).
    if Bp != B or Fp != F:
        x2d = jnp.pad(x2d, ((0, Bp - B), (0, Fp - F)))
    if Fp != F:
        w = jnp.pad(w, ((0, 0), (0, Fp - F)))

    grid = (Bp // tm, Fp // tk)

    # Explicit VMEM budget: double-buffered x tiles dominate; add w/out/acc + margin.
    sub_rows = max(tm, 8)
    lanes_k = pl.cdiv(tk, 128) * 128
    vmem_limit = (
        2 * sub_rows * lanes_k * 4          # double-buffered x tiles
        + 2 * 8 * lanes_k * 4               # double-buffered w tiles
        + 3 * sub_rows * 128 * 4            # out blocks + accumulator
        + (2 << 20)                         # margin
    )
    vmem_limit = int(min(max(vmem_limit, 4 << 20), 48 << 20))

    out = pl.pallas_call(
        lr_kernel,
        out_shape=jax.ShapeDtypeStruct((Bp, 1), jnp.float32),
        grid_spec=pltpu.PrefetchScalarGridSpec(
            num_scalar_prefetch=0,
            grid=grid,
            in_specs=[
                pl.BlockSpec((tm, tk), lambda i, k: (i, k)),        # x tile
                pl.BlockSpec((1, tk), lambda i, k: (0, k)),         # w tile (lane-major)
                pl.BlockSpec(memory_space=pltpu.MemorySpace.SMEM),  # bias scalar
            ],
            out_specs=pl.BlockSpec((tm, 1), lambda i, k: (i, 0)),
            scratch_shapes=[pltpu.VMEM((tm, 1), jnp.float32)],
        ),
        compiler_params=pltpu.CompilerParams(
            dimension_semantics=("parallel", "arbitrary"),
            vmem_limit_bytes=vmem_limit,
        ),
    )(x2d, w, b)

    return out[:B].astype(x.dtype)


if __name__ == "__main__":
    # Small shapes consistent with the module: LR(in_len=8, input_size=32)
    B, in_len, input_size = 2, 8, 32
    F = in_len * input_size

    key = jax.random.PRNGKey(0)
    kx, kw, kb = jax.random.split(key, 3)

    x = jax.random.normal(kx, (B, in_len, input_size), dtype=jnp.float32)
    # Deterministic parameter init (PyTorch Linear default is U(-1/sqrt(F), 1/sqrt(F)))
    bound = 1.0 / jnp.sqrt(jnp.float32(F))
    weight = jax.random.uniform(kw, (1, F), minval=-bound, maxval=bound,
                                dtype=jnp.float32)
    bias = jax.random.uniform(kb, (1,), minval=-bound, maxval=bound,
                              dtype=jnp.float32)

    y = lr_forward(x, weight, bias)
    jax.block_until_ready(y)

    # Cross-check against plain JAX reference.
    y_ref = x.reshape(B, -1) @ weight.T + bias
    assert y.shape == (B, 1)
    assert jnp.allclose(y, y_ref, atol=1e-5, rtol=1e-5)

    print("KERNEL_OK")
</pallas_src>

<mosaic_0001>
module attributes {stable_mosaic.version = 11 : i64} {
  func.func @lr_kernel(%arg0: i32, %arg1: i32, %arg2: memref<2x256xf32, #tpu.memory_space<vmem>>, %arg3: memref<1x256xf32, #tpu.memory_space<vmem>>, %arg4: memref<1xf32, #tpu.memory_space<smem>>, %arg5: memref<2x1xf32, #tpu.memory_space<vmem>>, %arg6: memref<2x1xf32, #tpu.memory_space<vmem>>) attributes {dimension_semantics = [#tpu.dimension_semantics<parallel>, #tpu.dimension_semantics<arbitrary>], iteration_bounds = array<i64: 1, 1>, scalar_prefetch = 0 : i64, scratch_operands = 1 : i64, tpu.core_type = #tpu.core_type<tc>, window_params = [{transform_indices = @transform_0, window_bounds = array<i64: 2, 256>}, {transform_indices = @transform_1, window_bounds = array<i64: 1, 256>}, {transform_indices = @transform_2, window_bounds = array<i64: 1>}, {transform_indices = @transform_3, window_bounds = array<i64: 2, 1>}]} {
    %c0_i32 = arith.constant 0 : i32
    %0 = arith.cmpi eq, %arg1, %c0_i32 : i32
    %1 = arith.extui %0 : i1 to i32
    %c0_i32_0 = arith.constant 0 : i32
    %2 = arith.cmpi ne, %1, %c0_i32_0 : i32
    scf.if %2 {
      %c0_10 = arith.constant 0 : index
      %15 = memref.load %arg4[%c0_10] : memref<1xf32, #tpu.memory_space<smem>>
      %16 = vector.broadcast %15 : f32 to vector<2x1xf32>
      %c0_11 = arith.constant 0 : index
      %c0_12 = arith.constant 0 : index
      %17 = vector.load %arg6[%c0_11, %c0_12] : memref<2x1xf32, #tpu.memory_space<vmem>>, vector<2x1xf32>
      tpu.vector_store %arg6[%c0_11, %c0_12], %16 {strides = array<i32>} : memref<2x1xf32, #tpu.memory_space<vmem>>, vector<2x1xf32>,
    } else {
    }
    %c0 = arith.constant 0 : index
    %c0_1 = arith.constant 0 : index
    %3 = vector.load %arg6[%c0, %c0_1] : memref<2x1xf32, #tpu.memory_space<vmem>>, vector<2x1xf32>
    %c0_2 = arith.constant 0 : index
    %c0_3 = arith.constant 0 : index
    %4 = vector.load %arg2[%c0_2, %c0_3] : memref<2x256xf32, #tpu.memory_space<vmem>>, vector<2x256xf32>
    %c0_4 = arith.constant 0 : index
    %c0_5 = arith.constant 0 : index
    %5 = vector.load %arg3[%c0_4, %c0_5] : memref<1x256xf32, #tpu.memory_space<vmem>>, vector<1x256xf32>
    %6 = vector.broadcast %5 : vector<1x256xf32> to vector<2x256xf32>
    %7 = arith.mulf %4, %6 : vector<2x256xf32>
    %cst = arith.constant dense<0.000000e+00> : vector<2xf32>
    %8 = vector.multi_reduction <add>, %7, %cst [1] : vector<2x256xf32> to vector<2xf32>
    %9 = vector.shape_cast %8 : vector<2xf32> to vector<2x1xf32>
    %10 = arith.addf %3, %9 : vector<2x1xf32>
    %c0_6 = arith.constant 0 : index
    %c0_7 = arith.constant 0 : index
    %11 = vector.load %arg6[%c0_6, %c0_7] : memref<2x1xf32, #tpu.memory_space<vmem>>, vector<2x1xf32>
    tpu.vector_store %arg6[%c0_6, %c0_7], %10 {strides = array<i32>} : memref<2x1xf32, #tpu.memory_space<vmem>>, vector<2x1xf32>,
    %c0_i32_8 = arith.constant 0 : i32
    %12 = arith.cmpi eq, %arg1, %c0_i32_8 : i32
    %13 = arith.extui %12 : i1 to i32
    %c0_i32_9 = arith.constant 0 : i32
    %14 = arith.cmpi ne, %13, %c0_i32_9 : i32
    scf.if %14 {
      %c0_10 = arith.constant 0 : index
      %c0_11 = arith.constant 0 : index
      %15 = vector.load %arg6[%c0_10, %c0_11] : memref<2x1xf32, #tpu.memory_space<vmem>>, vector<2x1xf32>
      %c0_12 = arith.constant 0 : index
      %c0_13 = arith.constant 0 : index
      %16 = vector.load %arg5[%c0_12, %c0_13] : memref<2x1xf32, #tpu.memory_space<vmem>>, vector<2x1xf32>
      tpu.vector_store %arg5[%c0_12, %c0_13], %15 {strides = array<i32>} : memref<2x1xf32, #tpu.memory_space<vmem>>, vector<2x1xf32>,
    } else {
    }
    return
  }
  func.func @transform_0(%arg0: i32, %arg1: i32) -> (i32, i32) {
    %c0_i32 = arith.constant 0 : i32
    return %arg0, %arg1 : i32, i32
  }
  func.func @transform_1(%arg0: i32, %arg1: i32) -> (i32, i32) {
    %c0_i32 = arith.constant 0 : i32
    %c0_i32_0 = arith.constant 0 : i32
    return %c0_i32, %arg1 : i32, i32
  }
  func.func @transform_2(%arg0: i32, %arg1: i32) -> i32 {
    %c0_i32 = arith.constant 0 : i32
    %c0_i32_0 = arith.constant 0 : i32
    return %c0_i32 : i32
  }
  func.func @transform_3(%arg0: i32, %arg1: i32) -> (i32, i32) {
    %c0_i32 = arith.constant 0 : i32
    %c0_i32_0 = arith.constant 0 : i32
    return %arg0, %c0_i32 : i32, i32
  }
}

</mosaic_0001>

<llo_original>
// kernel: tpu_custom_call.1
$region0: #{tpu_custom_call.1}
  #allocation0 [shape = 'u32[]', space=smem, size = 0x4, offset = 0x4, fixed_abs, tag = 'smem constant byte address 0x4 - core index']
  #allocation1 [shape = 'u32[144,128]{1,0:T(1,128)}', space=vmem, size = 0x12000, scoped, tag = 'internal scratch']
  #allocation2 [shape = 'f32[2,1]{1,0:T(2,128)}', space=vmem, size = 0x400, scoped, tag = 'scratch operand']
  #allocation3 [shape = 'f32[1]{0:T(128)S(6)}', space=smem, size = 0x200, scoped, tag = 'scoped memory for tpu_custom_call.1']
  %s0 = inlined_call_operand.hbm [shape: f32[2,256], index: 0, kind: input, shape index: {}]
  %s1 = inlined_call_operand.vmem [shape: f32[1,256], index: 1, kind: input, shape index: {}]
  %s2 = inlined_call_operand.<no memory space> [shape: f32[1], index: 2, kind: input, shape index: {}]
  %s3 = inlined_call_operand.vmem [shape: f32[2,1], index: 3, kind: output, shape index: {}]
  %s4 = sld [smem:[#allocation0]]
  $region34: #{tpu_custom_call.1} parent=0
    _
  %s6 = ssub.s32 1, %s4
  %s7 = scalar_select 0, %s6, %s4
  %8 = sst [smem:[#allocation3]] %s2
  $region1: #{tpu_custom_call.1} parent=0
    #allocation4 [shape = 'u8[2048]{0}', space=vmem, size = 0x800, scoped, tag = 'input window, operand 0, single buffered']
    #allocation5 [shape = 's32[1]{0}', space=sflag, size = 0x4, scoped, tag = 'scoped memory for tpu_custom_call.1']
    %9 = vsyncpa [#allocation5], 0
    // Predicated region
    $region2: #{tpu_custom_call.1} parent=1 // pred_check
      _
    $region3: #{tpu_custom_call.1} parent=1 // pred_check_branch
      %11 = sbr.rel (0) target = $region5
    $region4: #{tpu_custom_call.1} parent=1 // pred_region
      %s13 = ssub.s32 64, 64
      %14 = vsyncadd [#allocation5], %s13
      %s16 = sshll.u32 [#allocation4], 4
      %s17 = int_to_ptr.vmem [resolvable:$true] %s16
      %19 = dma.hbm_to_vmem [thread:$0]  %s0, 64, %s17, [#allocation5]
    $region5: #{tpu_custom_call.1} parent=1 // pred_fallthru
      _
    // Predicated region
    $region6: #{tpu_custom_call.1} parent=1 // pred_check
      _
    $region7: #{tpu_custom_call.1} parent=1 // pred_check_branch
      %21 = sbr.rel (0) target = $region9
    $region8: #{tpu_custom_call.1} parent=1 // pred_region
      _
    $region9: #{tpu_custom_call.1} parent=1 // pred_fallthru
      _
    // Predicated region
    $region10: #{tpu_custom_call.1} parent=1 // pred_check
      _
    $region11: #{tpu_custom_call.1} parent=1 // pred_check_branch
      %23 = sbr.rel (0) target = $region13
    $region12: #{tpu_custom_call.1} parent=1 // pred_region
      _
    $region13: #{tpu_custom_call.1} parent=1 // pred_fallthru
      _
    // Predicated region
    $region14: #{tpu_custom_call.1} parent=1 // pred_check
      _
    $region15: #{tpu_custom_call.1} parent=1 // pred_check_branch
      %25 = sbr.rel (0) target = $region17
    $region16: #{tpu_custom_call.1} parent=1 // pred_region
      %26 = dma.done [#allocation5], 64
    $region17: #{tpu_custom_call.1} parent=1 // pred_fallthru
      _
    %p27 = scmp.eq.s32.totalorder 0, 0
    // Predicated region
    $region18: #{tpu_custom_call.1} parent=1 // pred_check
      %p28 = pneg %p27
    $region19: #{tpu_custom_call.1} parent=1 // pred_check_branch
      %30 = sbr.rel (%p28) target = $region21
    $region20: #{tpu_custom_call.1} parent=1 // pred_region
      %s31 = sld [smem:[#allocation3]]
      %v32 = vstv %s31
      %vm33 = vcmask 1024
      %34 = vst.msk [vmem:[#allocation2] sm:$0x3] %vm33, %v32
    $region21: #{tpu_custom_call.1} parent=1 // pred_fallthru
      _
    %v35 = vld [vmem:[#allocation2] sm:$0x3]
    %v36 = vld [vmem:[#allocation4] sm:$0xf]
    %v37 = vld [vmem:[%s1] sm:$0x3]
    %v39 = vlaneseq
    %v40 = vshrl.u32 %v39, 7
    %v41 = vsub.s32 0, %v40
    %v42 = vrot.slane %v37, %v41
    %v43 = vlaneseq
    %v44 = vshrl.u32 %v43, 7
    %v45 = vsub.s32 1, %v44
    %v46 = vrot.slane %v37, %v45
    %v47 = vcombine.low %v42, %v46
    %v49 = vunpack.c.l.s4 1983009808
    %v50 = vunpack.c.0.s8 %v49
    %v51 = vlaneseq
    %v52 = vshrl.u32 %v51, 7
    %v53 = vsub.s32 %v50, %v52
    %v54 = vrot.slane %v47, %v53
    %v56 = vmul.f32 %v36, %v54
    %v59 = vunpack.c.l.s4 1983009808
    %v60 = vunpack.c.0.s8 %v59
    %v61 = vlaneseq
    %v62 = vshrl.u32 %v61, 7
    %v63 = vsub.s32 %v60, %v62
    %v64 = vrot.slane %v56, %v63
    %v65 = vcombine.high %v64, %v64
    %vm68 = vcmask 1041408
    %v69 = vsel %vm68, %v64, 0.0
    %v70 = vsel %vm68, %v65, 0.0
    %v71 = vadd.f32 %v69, %v70
    %72 = vadd.xlane.f32.xlu0 %v71
    %v73 = vpop.xlane.xlu0 %72
    %v74 = vadd.f32 %v35, %v73
    %vm75 = vcmask 1024
    %76 = vst.msk [vmem:[#allocation2] sm:$0x3] %vm75, %v74
    // Predicated region
    $region22: #{tpu_custom_call.1} parent=1 // pred_check
      %p77 = pneg %p27
    $region23: #{tpu_custom_call.1} parent=1 // pred_check_branch
      %79 = sbr.rel (%p77) target = $region25
    $region24: #{tpu_custom_call.1} parent=1 // pred_region
      %v80 = vld [vmem:[#allocation2] sm:$0x3]
      %81 = vst.msk [vmem:[%s3] sm:$0x3] %vm75, %v80
    $region25: #{tpu_custom_call.1} parent=1 // pred_fallthru
      _
    // Predicated region
    $region26: #{tpu_custom_call.1} parent=1 // pred_check
      _
    $region27: #{tpu_custom_call.1} parent=1 // pred_check_branch
      %83 = sbr.rel (0) target = $region29
    $region28: #{tpu_custom_call.1} parent=1 // pred_region
      _
    $region29: #{tpu_custom_call.1} parent=1 // pred_fallthru
      _
    // Predicated region
    $region30: #{tpu_custom_call.1} parent=1 // pred_check
      _
    $region31: #{tpu_custom_call.1} parent=1 // pred_check_branch
      %85 = sbr.rel (0) target = $region33
    $region32: #{tpu_custom_call.1} parent=1 // pred_region
      _
    $region33: #{tpu_custom_call.1} parent=1 // pred_fallthru
      _
    %86 = vsyncpa [#allocation5], 1

</llo_original>
